<compile_context>
chip_gen: v6e
topology: v6e:2x2x1
jax: 0.10.0
libtpu: 0.0.40
codegen_flags: <defaults>
</compile_context>

<pallas_src>
import functools

import jax
import jax.numpy as jnp
from jax.experimental import pallas as pl
from jax.experimental.pallas import tpu as pltpu

LANE = 128


def _round_up(n, m):
    return ((n + m - 1) // m) * m


def _pad_dim(x, axis, target):
    pad = target - x.shape[axis]
    if pad <= 0:
        return x
    cfg = [(0, 0)] * x.ndim
    cfg[axis] = (0, pad)
    return jnp.pad(x, cfg)


def _gcn_kernel(n_layers, compute_dtype, v_ref, adj_ref, *rest):
    # rest = (w_0, ..., w_{L-1}, w_out, b_out, o_ref)
    w_refs = rest[:n_layers]
    wout_ref = rest[n_layers]
    bout_ref = rest[n_layers + 1]
    o_ref = rest[n_layers + 2]

    x = v_ref[...].astype(compute_dtype)        # (bt, N, F)
    adj = adj_ref[...].astype(compute_dtype)    # (bt, N, N)
    bt, N, _ = x.shape

    # Hidden GraphConvolution layers: relu(adj @ (x @ W)), bias=False.
    # TODO(synk): F.dropout is a no-op in eval mode; training-mode dropout not implemented.
    for w_ref in w_refs:
        w = w_ref[...].astype(compute_dtype)                        # (din, dout)
        # One MXU call with bt*N rows instead of bt tiny ones.
        h = jnp.dot(x.reshape(bt * N, x.shape[-1]), w,
                    preferred_element_type=jnp.float32)             # (bt*N, H) f32
        h = h.reshape(bt, N, -1).astype(compute_dtype)
        h = jnp.einsum("bnm,bmh->bnh", adj, h,
                       preferred_element_type=jnp.float32)          # (bt, N, H) f32
        x = jnp.maximum(h, 0.0).astype(compute_dtype)               # relu

    # Head: batched (bt, N) @ (N, label_p) + bias; lane-dense (bt, 128) store.
    s = jnp.sum(x.astype(jnp.float32), axis=-1)                     # (bt, N) f32
    out = jnp.dot(s.astype(wout_ref.dtype), wout_ref[...],
                  preferred_element_type=jnp.float32) + bout_ref[...]
    o_ref[...] = out.astype(o_ref.dtype)


def prepare_gcn_params(gc_weights, w_out, b_out, large_model=False):
    """One-time parameter layout prep (NOT per forward call).

    gc_weights: list of (in_dim, out_dim) GraphConvolution weights
                (PyTorch stores Linear weights transposed; pass them as (in, out)).
    w_out:      (nb_nodes, label)  head weight (pre-transposed)
    b_out:      (label,) or (1, label) head bias
    """
    w_dtype = jnp.bfloat16 if large_model else jnp.float32
    gc_p = tuple(jnp.asarray(w, dtype=w_dtype) for w in gc_weights)

    label = w_out.shape[1]
    label_p = _round_up(label, LANE)
    w_out_p = _pad_dim(jnp.asarray(w_out, jnp.float32), 1, label_p)      # (N, Lp)
    b_out_p = _pad_dim(jnp.asarray(b_out, jnp.float32).reshape(1, -1),
                       1, label_p)                                       # (1, Lp)
    return gc_p, w_out_p, b_out_p, label


def gcn_simple_forward(v, adj, params):
    """GCN_simple forward (eval mode) with one Pallas TPU kernel."""
    gc_p, w_out_p, b_out_p, label = params
    B, N, F = v.shape
    label_p = w_out_p.shape[1]
    n_layers = len(gc_p)

    # Size-dependent MXU operand dtype: bf16 only pays once adj's DMA bytes
    # are significant; for small graphs keep f32 end to end (no VPU cast cost
    # on v5e, no extra wrapper convert ops).
    adj_bytes = B * N * N * 4
    use_bf16 = adj_bytes >= (4 << 20)
    compute_dtype = jnp.bfloat16 if use_bf16 else jnp.float32
    if use_bf16:
        v = v.astype(jnp.bfloat16)
        adj = adj.astype(jnp.bfloat16)
    else:
        v = v.astype(jnp.float32)
        adj = adj.astype(jnp.float32)

    # Batch tiling: one step for tiny batches; 8-sample tiles for big ones so
    # the "parallel" axis shards across v7x's 2 TensorCores and per-step VMEM
    # stays bounded.
    if B >= 16 and B % 8 == 0:
        bt = 8
    else:
        bt = B
    grid = (B // bt,)

    in_specs = [
        pl.BlockSpec((bt, N, F), lambda b: (b, 0, 0)),
        pl.BlockSpec((bt, N, N), lambda b: (b, 0, 0)),
    ]
    for w in gc_p:
        in_specs.append(pl.BlockSpec(w.shape, lambda b: (0, 0)))
    in_specs.append(pl.BlockSpec(w_out_p.shape, lambda b: (0, 0)))
    in_specs.append(pl.BlockSpec(b_out_p.shape, lambda b: (0, 0)))
    out_spec = pl.BlockSpec((bt, label_p), lambda b: (b, 0))

    # VMEM budget: per-step activation blocks (double-buffered) + weights,
    # with headroom; capped for v7x's smaller VMEM.
    itemsize = 2 if use_bf16 else 4
    blk_bytes = (bt * N * F + bt * N * N) * itemsize
    blk_bytes += sum(int(w.size) * w.dtype.itemsize for w in gc_p)
    blk_bytes += w_out_p.size * 4 + b_out_p.size * 4 + bt * label_p * 4
    vmem_limit = int(min(64 << 20, max(32 << 20, 4 * blk_bytes)))

    kernel = functools.partial(_gcn_kernel, n_layers, compute_dtype)

    out_p = pl.pallas_call(
        kernel,
        grid=grid,
        in_specs=in_specs,
        out_specs=out_spec,
        out_shape=jax.ShapeDtypeStruct((B, label_p), jnp.float32),
        compiler_params=pltpu.CompilerParams(
            dimension_semantics=("parallel",),
            vmem_limit_bytes=vmem_limit),
    )(v, adj, *gc_p, w_out_p, b_out_p)

    return out_p[:, :label]


if __name__ == "__main__":
    # Small shapes consistent with the module:
    #   feats=8, hidden=[32, 32], label=4, nb_nodes=16, batch=2
    B, N, F = 2, 16, 8
    hidden = [32, 32]
    label = 4

    key = jax.random.PRNGKey(0)
    keys = jax.random.split(key, 8)

    v = jax.random.normal(keys[0], (B, N, F), dtype=jnp.float32)

    # Dense adjacency (self-loops + row normalization); sparsize() only changes
    # the storage format, not the values, so dense is semantically equivalent.
    a = (jax.random.uniform(keys[1], (B, N, N)) > 0.7).astype(jnp.float32)
    adj = a + jnp.eye(N, dtype=jnp.float32)[None]
    adj = adj / jnp.sum(adj, axis=-1, keepdims=True)

    # Deterministic parameter init (shapes follow the module's __init__);
    # GraphConvolution weights stored pre-transposed as (in, out).
    dims = [F] + hidden
    gc_weights = []
    for i, (din, dout) in enumerate(zip(dims[:-1], dims[1:])):
        w = jax.random.normal(keys[2 + i], (din, dout), dtype=jnp.float32)
        gc_weights.append(w / jnp.sqrt(jnp.float32(din)))
    w_out = jax.random.normal(keys[5], (N, label), dtype=jnp.float32) / jnp.sqrt(
        jnp.float32(N))
    b_out = 0.01 * jax.random.normal(keys[6], (1, label), dtype=jnp.float32)

    # One-time parameter prep (hoisted out of the per-call path).
    params = prepare_gcn_params(gc_weights, w_out, b_out, large_model=False)

    out = gcn_simple_forward(v, adj, params)
    out = jax.block_until_ready(out)
    assert out.shape == (B, label), out.shape
    assert bool(jnp.all(jnp.isfinite(out)))

    # Pure-JAX reference check (f32 path, so results should match tightly).
    x_ref = v
    for w in gc_weights:
        x_ref = jnp.maximum(jnp.einsum("bnm,bmh->bnh", adj, x_ref @ w), 0.0)
    ref = x_ref.sum(axis=-1) @ w_out + b_out
    assert bool(jnp.allclose(out, ref, atol=1e-4, rtol=1e-4))

    print("KERNEL_OK")
</pallas_src>

<mosaic_0001>
module attributes {stable_mosaic.version = 11 : i64} {
  func.func @_gcn_kernel(%arg0: i32, %arg1: memref<2x16x8xf32, #tpu.memory_space<vmem>>, %arg2: memref<2x16x16xf32, #tpu.memory_space<vmem>>, %arg3: memref<8x32xf32, #tpu.memory_space<vmem>>, %arg4: memref<32x32xf32, #tpu.memory_space<vmem>>, %arg5: memref<16x128xf32, #tpu.memory_space<vmem>>, %arg6: memref<1x128xf32, #tpu.memory_space<vmem>>, %arg7: memref<2x128xf32, #tpu.memory_space<vmem>>) attributes {dimension_semantics = [#tpu.dimension_semantics<parallel>], iteration_bounds = array<i64: 1>, scalar_prefetch = 0 : i64, scratch_operands = 0 : i64, tpu.core_type = #tpu.core_type<tc>, window_params = [{transform_indices = @transform_0, window_bounds = array<i64: 2, 16, 8>}, {transform_indices = @transform_1, window_bounds = array<i64: 2, 16, 16>}, {pipeline_mode = #tpu.pipeline_mode<synchronous>, transform_indices = @transform_2, window_bounds = array<i64: 8, 32>}, {pipeline_mode = #tpu.pipeline_mode<synchronous>, transform_indices = @transform_3, window_bounds = array<i64: 32, 32>}, {pipeline_mode = #tpu.pipeline_mode<synchronous>, transform_indices = @transform_4, window_bounds = array<i64: 16, 128>}, {pipeline_mode = #tpu.pipeline_mode<synchronous>, transform_indices = @transform_5, window_bounds = array<i64: 1, 128>}, {transform_indices = @transform_6, window_bounds = array<i64: 2, 128>}]} {
    %c0 = arith.constant 0 : index
    %c0_0 = arith.constant 0 : index
    %c0_1 = arith.constant 0 : index
    %0 = vector.load %arg1[%c0, %c0_0, %c0_1] : memref<2x16x8xf32, #tpu.memory_space<vmem>>, vector<2x16x8xf32>
    %c0_2 = arith.constant 0 : index
    %c0_3 = arith.constant 0 : index
    %c0_4 = arith.constant 0 : index
    %1 = vector.load %arg2[%c0_2, %c0_3, %c0_4] : memref<2x16x16xf32, #tpu.memory_space<vmem>>, vector<2x16x16xf32>
    %c0_5 = arith.constant 0 : index
    %c0_6 = arith.constant 0 : index
    %2 = vector.load %arg3[%c0_5, %c0_6] : memref<8x32xf32, #tpu.memory_space<vmem>>, vector<8x32xf32>
    %3 = vector.shape_cast %0 : vector<2x16x8xf32> to vector<32x8xf32>
    %cst = arith.constant dense<0.000000e+00> : vector<32x32xf32>
    %4 = tpu.matmul %3, %2, %cst {dimension_numbers = #tpu.dot_dimension_numbers<[1], [0], [0], [1], [0, 0, 1, 1], [], []>} : vector<32x8xf32>, vector<8x32xf32>, vector<32x32xf32> -> vector<32x32xf32>
    %5 = vector.shape_cast %4 : vector<32x32xf32> to vector<2x16x32xf32>
    "tpu.trace_start"() <{level = 10 : i32, message = "bnm,bmh->bnh"}> : () -> ()
    %cst_7 = arith.constant dense<0.000000e+00> : vector<2x16x32xf32>
    %6 = tpu.matmul %1, %5, %cst_7 {dimension_numbers = #tpu.dot_dimension_numbers<[2], [1], [1], [2], [0, 0, 0, 1, 1, 2], [0], [0]>} : vector<2x16x16xf32>, vector<2x16x32xf32>, vector<2x16x32xf32> -> vector<2x16x32xf32>
    "tpu.trace_stop"() : () -> ()
    %cst_8 = arith.constant 0.000000e+00 : f32
    %7 = vector.broadcast %cst_8 : f32 to vector<2x16x32xf32>
    %8 = arith.maximumf %6, %7 : vector<2x16x32xf32>
    %c0_9 = arith.constant 0 : index
    %c0_10 = arith.constant 0 : index
    %9 = vector.load %arg4[%c0_9, %c0_10] : memref<32x32xf32, #tpu.memory_space<vmem>>, vector<32x32xf32>
    %10 = vector.shape_cast %8 : vector<2x16x32xf32> to vector<32x32xf32>
    %cst_11 = arith.constant dense<0.000000e+00> : vector<32x32xf32>
    %11 = tpu.matmul %10, %9, %cst_11 {dimension_numbers = #tpu.dot_dimension_numbers<[1], [0], [0], [1], [0, 0, 1, 1], [], []>} : vector<32x32xf32>, vector<32x32xf32>, vector<32x32xf32> -> vector<32x32xf32>
    %12 = vector.shape_cast %11 : vector<32x32xf32> to vector<2x16x32xf32>
    "tpu.trace_start"() <{level = 10 : i32, message = "bnm,bmh->bnh"}> : () -> ()
    %cst_12 = arith.constant dense<0.000000e+00> : vector<2x16x32xf32>
    %13 = tpu.matmul %1, %12, %cst_12 {dimension_numbers = #tpu.dot_dimension_numbers<[2], [1], [1], [2], [0, 0, 0, 1, 1, 2], [0], [0]>} : vector<2x16x16xf32>, vector<2x16x32xf32>, vector<2x16x32xf32> -> vector<2x16x32xf32>
    "tpu.trace_stop"() : () -> ()
    %cst_13 = arith.constant 0.000000e+00 : f32
    %14 = vector.broadcast %cst_13 : f32 to vector<2x16x32xf32>
    %15 = arith.maximumf %13, %14 : vector<2x16x32xf32>
    %cst_14 = arith.constant dense<0.000000e+00> : vector<2x16xf32>
    %16 = vector.multi_reduction <add>, %15, %cst_14 [2] : vector<2x16x32xf32> to vector<2x16xf32>
    %c0_15 = arith.constant 0 : index
    %c0_16 = arith.constant 0 : index
    %17 = vector.load %arg5[%c0_15, %c0_16] : memref<16x128xf32, #tpu.memory_space<vmem>>, vector<16x128xf32>
    %cst_17 = arith.constant dense<0.000000e+00> : vector<2x128xf32>
    %18 = tpu.matmul %16, %17, %cst_17 {dimension_numbers = #tpu.dot_dimension_numbers<[1], [0], [0], [1], [0, 0, 1, 1], [], []>} : vector<2x16xf32>, vector<16x128xf32>, vector<2x128xf32> -> vector<2x128xf32>
    %c0_18 = arith.constant 0 : index
    %c0_19 = arith.constant 0 : index
    %19 = vector.load %arg6[%c0_18, %c0_19] : memref<1x128xf32, #tpu.memory_space<vmem>>, vector<1x128xf32>
    %20 = vector.broadcast %19 : vector<1x128xf32> to vector<2x128xf32>
    %21 = arith.addf %18, %20 : vector<2x128xf32>
    %c0_20 = arith.constant 0 : index
    %c0_21 = arith.constant 0 : index
    %22 = vector.load %arg7[%c0_20, %c0_21] : memref<2x128xf32, #tpu.memory_space<vmem>>, vector<2x128xf32>
    tpu.vector_store %arg7[%c0_20, %c0_21], %21 {strides = array<i32>} : memref<2x128xf32, #tpu.memory_space<vmem>>, vector<2x128xf32>,
    return
  }
  func.func @transform_0(%arg0: i32) -> (i32, i32, i32) {
    %c0_i32 = arith.constant 0 : i32
    %c0_i32_0 = arith.constant 0 : i32
    %c0_i32_1 = arith.constant 0 : i32
    return %arg0, %c0_i32, %c0_i32_0 : i32, i32, i32
  }
  func.func @transform_1(%arg0: i32) -> (i32, i32, i32) {
    %c0_i32 = arith.constant 0 : i32
    %c0_i32_0 = arith.constant 0 : i32
    %c0_i32_1 = arith.constant 0 : i32
    return %arg0, %c0_i32, %c0_i32_0 : i32, i32, i32
  }
  func.func @transform_2(%arg0: i32) -> (i32, i32) {
    %c0_i32 = arith.constant 0 : i32
    %c0_i32_0 = arith.constant 0 : i32
    %c0_i32_1 = arith.constant 0 : i32
    return %c0_i32, %c0_i32_0 : i32, i32
  }
  func.func @transform_3(%arg0: i32) -> (i32, i32) {
    %c0_i32 = arith.constant 0 : i32
    %c0_i32_0 = arith.constant 0 : i32
    %c0_i32_1 = arith.constant 0 : i32
    return %c0_i32, %c0_i32_0 : i32, i32
  }
  func.func @transform_4(%arg0: i32) -> (i32, i32) {
    %c0_i32 = arith.constant 0 : i32
    %c0_i32_0 = arith.constant 0 : i32
    %c0_i32_1 = arith.constant 0 : i32
    return %c0_i32, %c0_i32_0 : i32, i32
  }
  func.func @transform_5(%arg0: i32) -> (i32, i32) {
    %c0_i32 = arith.constant 0 : i32
    %c0_i32_0 = arith.constant 0 : i32
    %c0_i32_1 = arith.constant 0 : i32
    return %c0_i32, %c0_i32_0 : i32, i32
  }
  func.func @transform_6(%arg0: i32) -> (i32, i32) {
    %c0_i32 = arith.constant 0 : i32
    %c0_i32_0 = arith.constant 0 : i32
    return %arg0, %c0_i32 : i32, i32
  }
}

</mosaic_0001>

<llo_original>
// kernel: tpu_custom_call.1
$region0: #{tpu_custom_call.1}
  #allocation0 [shape = 'u32[]', space=smem, size = 0x4, offset = 0x4, fixed_abs, tag = 'smem constant byte address 0x4 - core index']
  #allocation1 [shape = 'u32[144,128]{1,0:T(1,128)}', space=vmem, size = 0x12000, scoped, tag = 'internal scratch']
  %s0 = inlined_call_operand.vmem [shape: f32[2,16,8], index: 0, kind: input, shape index: {}]
  %s1 = inlined_call_operand.vmem [shape: f32[2,16,16], index: 1, kind: input, shape index: {}]
  %s2 = inlined_call_operand.hbm [shape: f32[8,32], index: 2, kind: input, shape index: {}]
  %s3 = inlined_call_operand.hbm [shape: f32[32,32], index: 3, kind: input, shape index: {}]
  %s4 = inlined_call_operand.vmem [shape: f32[16,128], index: 4, kind: input, shape index: {}]
  %s5 = inlined_call_operand.vmem [shape: f32[1,128], index: 5, kind: input, shape index: {}]
  %s6 = inlined_call_operand.hbm [shape: f32[2,128], index: 6, kind: output, shape index: {}]
  %s7 = sld [smem:[#allocation0]]
  $region42: #{tpu_custom_call.1} parent=0
    _
  %s9 = ssub.s32 1, %s7
  %s10 = scalar_select 0, %s9, %s7
  $region1: #{tpu_custom_call.1} parent=0
    #allocation2 [shape = 'u8[4096]{0}', space=vmem, size = 0x1000, scoped, tag = 'input window, operand 2, single buffered']
    #allocation3 [shape = 's32[1]{0}', space=sflag, size = 0x4, scoped, tag = 'scoped memory for tpu_custom_call.1']
    #allocation4 [shape = 's32[1]{0}', space=sflag, size = 0x4, scoped, tag = 'scoped memory for tpu_custom_call.1']
    #allocation5 [shape = 'u8[16384]{0}', space=vmem, size = 0x4000, scoped, tag = 'input window, operand 3, single buffered']
    #allocation6 [shape = 's32[1]{0}', space=sflag, size = 0x4, scoped, tag = 'scoped memory for tpu_custom_call.1']
    #allocation7 [shape = 'u8[1024]{0}', space=vmem, size = 0x400, scoped, tag = 'output window, operand 0, single buffered']
    %11 = vsyncpa [#allocation3], 0
    %12 = vsyncpa [#allocation6], 0
    %13 = vsyncpa [#allocation4], 0
    // Predicated region
    $region2: #{tpu_custom_call.1} parent=1 // pred_check
      _
    $region3: #{tpu_custom_call.1} parent=1 // pred_check_branch
      %15 = sbr.rel (0) target = $region5
    $region4: #{tpu_custom_call.1} parent=1 // pred_region
      _
    $region5: #{tpu_custom_call.1} parent=1 // pred_fallthru
      _
    // Predicated region
    $region6: #{tpu_custom_call.1} parent=1 // pred_check
      _
    $region7: #{tpu_custom_call.1} parent=1 // pred_check_branch
      %17 = sbr.rel (0) target = $region9
    $region8: #{tpu_custom_call.1} parent=1 // pred_region
      _
    $region9: #{tpu_custom_call.1} parent=1 // pred_fallthru
      _
    // Predicated region
    $region10: #{tpu_custom_call.1} parent=1 // pred_check
      _
    $region11: #{tpu_custom_call.1} parent=1 // pred_check_branch
      %19 = sbr.rel (0) target = $region13
    $region12: #{tpu_custom_call.1} parent=1 // pred_region
      %s21 = ssub.s32 128, 128
      %22 = vsyncadd [#allocation3], %s21
      %s24 = sshll.u32 [#allocation2], 4
      %s25 = int_to_ptr.vmem [resolvable:$true] %s24
      %27 = dma.hbm_to_vmem [thread:$0]  %s2, 128, %s25, [#allocation3]
    $region13: #{tpu_custom_call.1} parent=1 // pred_fallthru
      _
    // Predicated region
    $region14: #{tpu_custom_call.1} parent=1 // pred_check
      _
    $region15: #{tpu_custom_call.1} parent=1 // pred_check_branch
      %29 = sbr.rel (0) target = $region17
    $region16: #{tpu_custom_call.1} parent=1 // pred_region
      %s31 = ssub.s32 512, 512
      %32 = vsyncadd [#allocation6], %s31
      %s33 = sshll.u32 [#allocation5], 4
      %s34 = int_to_ptr.vmem [resolvable:$true] %s33
      %39 = dma.hbm_to_vmem [thread:$0]  %s3, 512, %s34, [#allocation6], 128, 128, 8
    $region17: #{tpu_custom_call.1} parent=1 // pred_fallthru
      _
    // Predicated region
    $region18: #{tpu_custom_call.1} parent=1 // pred_check
      _
    $region19: #{tpu_custom_call.1} parent=1 // pred_check_branch
      %41 = sbr.rel (0) target = $region21
    $region20: #{tpu_custom_call.1} parent=1 // pred_region
      _
    $region21: #{tpu_custom_call.1} parent=1 // pred_fallthru
      _
    // Predicated region
    $region22: #{tpu_custom_call.1} parent=1 // pred_check
      _
    $region23: #{tpu_custom_call.1} parent=1 // pred_check_branch
      %43 = sbr.rel (0) target = $region25
    $region24: #{tpu_custom_call.1} parent=1 // pred_region
      _
    $region25: #{tpu_custom_call.1} parent=1 // pred_fallthru
      _
    // Predicated region
    $region26: #{tpu_custom_call.1} parent=1 // pred_check
      _
    $region27: #{tpu_custom_call.1} parent=1 // pred_check_branch
      %45 = sbr.rel (0) target = $region29
    $region28: #{tpu_custom_call.1} parent=1 // pred_region
      %46 = dma.done [#allocation3], 128
    $region29: #{tpu_custom_call.1} parent=1 // pred_fallthru
      _
    // Predicated region
    $region30: #{tpu_custom_call.1} parent=1 // pred_check
      _
    $region31: #{tpu_custom_call.1} parent=1 // pred_check_branch
      %48 = sbr.rel (0) target = $region33
    $region32: #{tpu_custom_call.1} parent=1 // pred_region
      %49 = dma.done [#allocation6], 512
    $region33: #{tpu_custom_call.1} parent=1 // pred_fallthru
      _
    %v50 = vld [vmem:[%s0] sm:$0xff]
    %v51 = vld [vmem:[%s0 + $0x8] sm:$0xff]
    %v52 = vld [vmem:[%s0 + $0x10] sm:$0xff]
    %v53 = vld [vmem:[%s0 + $0x18] sm:$0xff]
    %v54 = vld [vmem:[%s1] sm:$0xff]
    %v55 = vld [vmem:[%s1 + $0x8] sm:$0xff]
    %v56 = vld [vmem:[%s1 + $0x10] sm:$0xff]
    %v57 = vld [vmem:[%s1 + $0x18] sm:$0xff]
    %v58 = vld [vmem:[#allocation2] sm:$0xff]
    %vm59 = vcmask 64512
    %v61 = vsel %vm59, %v50, 0
    %v64 = vsel %vm59, %v51, 0
    %v67 = vsel %vm59, %v52, 0
    %v70 = vsel %vm59, %v53, 0
    %72 = vmatprep.subr.mxu0 0.0
    %73 = vmatpush1.msra.mxu0 0.0
    %74 = vmatprep.subr.mxu0 0.0
    %75 = vmatpush1.msra.mxu0 0.0
    %76 = vmatprep.subr.mxu0 0.0
    %77 = vmatpush1.msra.mxu0 0.0
    %78 = vmatprep.subr.mxu0 0.0
    %79 = vmatpush1.msra.mxu0 0.0
    %80 = vmatprep.subr.mxu0 0.0
    %81 = vmatpush1.msra.mxu0 0.0
    %82 = vmatprep.subr.mxu0 0.0
    %83 = vmatpush1.msra.mxu0 0.0
    %84 = vmatprep.subr.mxu0 0.0
    %85 = vmatpush1.msra.mxu0 0.0
    %86 = vmatprep.subr.mxu0 0.0
    %87 = vmatpush1.msra.mxu0 0.0
    %88 = vmatprep.subr.mxu0 0.0
    %89 = vmatpush1.msra.mxu0 0.0
    %90 = vmatprep.subr.mxu0 0.0
    %91 = vmatpush1.msra.mxu0 0.0
    %92 = vmatprep.subr.mxu0 0.0
    %93 = vmatpush1.msra.mxu0 0.0
    %94 = vmatprep.subr.mxu0 0.0
    %95 = vmatpush1.msra.mxu0 0.0
    %96 = vmatprep.subr.mxu0 0.0
    %97 = vmatpush1.msra.mxu0 0.0
    %98 = vmatprep.subr.mxu0 0.0
    %99 = vmatpush1.msra.mxu0 0.0
    %100 = vmatprep.subr.mxu0 0.0
    %101 = vmatpush1.msra.mxu0 0.0
    %102 = vmatprep.subr.mxu0 0.0
    %103 = vmatpush1.msra.mxu0 %v58
    %104 = vmatprep.subr.mxu0 0.0
    %105 = vmatpush2.msra.mxu0 0.0
    %106 = vmatprep.subr.mxu0 0.0
    %107 = vmatpush2.msra.mxu0 0.0
    %108 = vmatprep.subr.mxu0 0.0
    %109 = vmatpush2.msra.mxu0 0.0
    %110 = vmatprep.subr.mxu0 0.0
    %111 = vmatpush2.msra.mxu0 0.0
    %112 = vmatprep.subr.mxu0 0.0
    %113 = vmatpush2.msra.mxu0 0.0
    %114 = vmatprep.subr.mxu0 0.0
    %115 = vmatpush2.msra.mxu0 0.0
    %116 = vmatprep.subr.mxu0 0.0
    %117 = vmatpush2.msra.mxu0 0.0
    %118 = vmatprep.subr.mxu0 0.0
    %119 = vmatpush2.msra.mxu0 0.0
    %120 = vmatprep.subr.mxu0 0.0
    %121 = vmatpush2.msra.mxu0 0.0
    %122 = vmatprep.subr.mxu0 0.0
    %123 = vmatpush2.msra.mxu0 0.0
    %124 = vmatprep.subr.mxu0 0.0
    %125 = vmatpush2.msra.mxu0 0.0
    %126 = vmatprep.subr.mxu0 0.0
    %127 = vmatpush2.msra.mxu0 0.0
    %128 = vmatprep.subr.mxu0 0.0
    %129 = vmatpush2.msra.mxu0 0.0
    %130 = vmatprep.subr.mxu0 0.0
    %131 = vmatpush2.msra.mxu0 0.0
    %132 = vmatprep.subr.mxu0 0.0
    %133 = vmatpush2.msra.mxu0 0.0
    %134 = vmatprep.subr.mxu0 0.0
    %135 = vmatpush2.msra.mxu0 0.0
    %136 = vmatprep.mubr.f32.mxu0 0.0
    %137 = vmatmul.mubr.f32.gmra.mxu0 %v61
    %v138 = vpop.f32.mrf.mxu0
    %v139 = vadd.f32 0.0, %v138
    %v140 = vpop.f32.mrf.mxu0
    %141 = vmatprep.mubr.f32.mxu0 0.0
    %142 = vmatmul.mubr.f32.gmra.mxu0 %v64
    %v143 = vpop.f32.mrf.mxu0
    %v144 = vadd.f32 0.0, %v143
    %v145 = vpop.f32.mrf.mxu0
    %146 = vmatprep.mubr.f32.mxu0 0.0
    %147 = vmatmul.mubr.f32.gmra.mxu0 %v67
    %v148 = vpop.f32.mrf.mxu0
    %v149 = vadd.f32 0.0, %v148
    %v150 = vpop.f32.mrf.mxu0
    %151 = vmatprep.mubr.f32.mxu0 0.0
    %152 = vmatmul.mubr.f32.gmra.mxu0 %v70
    %v153 = vpop.f32.mrf.mxu0
    %v154 = vadd.f32 0.0, %v153
    %v155 = vpop.f32.mrf.mxu0
    %156 = vdwg.mxu0
    %vm157 = vcmask 130048
    %v159 = vsel %vm157, %v54, 0
    %v162 = vsel %vm157, %v55, 0
    %164 = vmatprep.subr.mxu0 0.0
    %165 = vmatpush1.msra.mxu0 0.0
    %166 = vmatprep.subr.mxu0 0.0
    %167 = vmatpush1.msra.mxu0 0.0
    %168 = vmatprep.subr.mxu0 0.0
    %169 = vmatpush1.msra.mxu0 0.0
    %170 = vmatprep.subr.mxu0 0.0
    %171 = vmatpush1.msra.mxu0 0.0
    %172 = vmatprep.subr.mxu0 0.0
    %173 = vmatpush1.msra.mxu0 0.0
    %174 = vmatprep.subr.mxu0 0.0
    %175 = vmatpush1.msra.mxu0 0.0
    %176 = vmatprep.subr.mxu0 0.0
    %177 = vmatpush1.msra.mxu0 0.0
    %178 = vmatprep.subr.mxu0 0.0
    %179 = vmatpush1.msra.mxu0 0.0
    %180 = vmatprep.subr.mxu0 0.0
    %181 = vmatpush1.msra.mxu0 0.0
    %182 = vmatprep.subr.mxu0 0.0
    %183 = vmatpush1.msra.mxu0 0.0
    %184 = vmatprep.subr.mxu0 0.0
    %185 = vmatpush1.msra.mxu0 0.0
    %186 = vmatprep.subr.mxu0 0.0
    %187 = vmatpush1.msra.mxu0 0.0
    %188 = vmatprep.subr.mxu0 0.0
    %189 = vmatpush1.msra.mxu0 0.0
    %190 = vmatprep.subr.mxu0 0.0
    %191 = vmatpush1.msra.mxu0 0.0
    %192 = vmatprep.subr.mxu0 0.0
    %193 = vmatpush1.msra.mxu0 %v144
    %194 = vmatprep.subr.mxu0 0.0
    %195 = vmatpush1.msra.mxu0 %v139
    %196 = vmatprep.subr.mxu0 0.0
    %197 = vmatpush2.msra.mxu0 0.0
    %198 = vmatprep.subr.mxu0 0.0
    %199 = vmatpush2.msra.mxu0 0.0
    %200 = vmatprep.subr.mxu0 0.0
    %201 = vmatpush2.msra.mxu0 0.0
    %202 = vmatprep.subr.mxu0 0.0
    %203 = vmatpush2.msra.mxu0 0.0
    %204 = vmatprep.subr.mxu0 0.0
    %205 = vmatpush2.msra.mxu0 0.0
    %206 = vmatprep.subr.mxu0 0.0
    %207 = vmatpush2.msra.mxu0 0.0
    %208 = vmatprep.subr.mxu0 0.0
    %209 = vmatpush2.msra.mxu0 0.0
    %210 = vmatprep.subr.mxu0 0.0
    %211 = vmatpush2.msra.mxu0 0.0
    %212 = vmatprep.subr.mxu0 0.0
    %213 = vmatpush2.msra.mxu0 0.0
    %214 = vmatprep.subr.mxu0 0.0
    %215 = vmatpush2.msra.mxu0 0.0
    %216 = vmatprep.subr.mxu0 0.0
    %217 = vmatpush2.msra.mxu0 0.0
    %218 = vmatprep.subr.mxu0 0.0
    %219 = vmatpush2.msra.mxu0 0.0
    %220 = vmatprep.subr.mxu0 0.0
    %221 = vmatpush2.msra.mxu0 0.0
    %222 = vmatprep.subr.mxu0 0.0
    %223 = vmatpush2.msra.mxu0 0.0
    %224 = vmatprep.subr.mxu0 0.0
    %225 = vmatpush2.msra.mxu0 0.0
    %226 = vmatprep.subr.mxu0 0.0
    %227 = vmatpush2.msra.mxu0 0.0
    %228 = vmatprep.mubr.f32.mxu0 0.0
    %229 = vmatmul.mubr.f32.gmra.mxu0 %v159
    %v230 = vpop.f32.mrf.mxu0
    %v231 = vadd.f32 0.0, %v230
    %v232 = vpop.f32.mrf.mxu0
    %233 = vmatprep.mubr.f32.mxu0 0.0
    %234 = vmatmul.mubr.f32.gmra.mxu0 %v162
    %v235 = vpop.f32.mrf.mxu0
    %v236 = vadd.f32 0.0, %v235
    %v237 = vpop.f32.mrf.mxu0
    %238 = vdwg.mxu0
    %v240 = vsel %vm157, %v56, 0
    %v243 = vsel %vm157, %v57, 0
    %245 = vmatprep.subr.mxu0 0.0
    %246 = vmatpush1.msra.mxu0 0.0
    %247 = vmatprep.subr.mxu0 0.0
    %248 = vmatpush1.msra.mxu0 0.0
    %249 = vmatprep.subr.mxu0 0.0
    %250 = vmatpush1.msra.mxu0 0.0
    %251 = vmatprep.subr.mxu0 0.0
    %252 = vmatpush1.msra.mxu0 0.0
    %253 = vmatprep.subr.mxu0 0.0
    %254 = vmatpush1.msra.mxu0 0.0
    %255 = vmatprep.subr.mxu0 0.0
    %256 = vmatpush1.msra.mxu0 0.0
    %257 = vmatprep.subr.mxu0 0.0
    %258 = vmatpush1.msra.mxu0 0.0
    %259 = vmatprep.subr.mxu0 0.0
    %260 = vmatpush1.msra.mxu0 0.0
    %261 = vmatprep.subr.mxu0 0.0
    %262 = vmatpush1.msra.mxu0 0.0
    %263 = vmatprep.subr.mxu0 0.0
    %264 = vmatpush1.msra.mxu0 0.0
    %265 = vmatprep.subr.mxu0 0.0
    %266 = vmatpush1.msra.mxu0 0.0
    %267 = vmatprep.subr.mxu0 0.0
    %268 = vmatpush1.msra.mxu0 0.0
    %269 = vmatprep.subr.mxu0 0.0
    %270 = vmatpush1.msra.mxu0 0.0
    %271 = vmatprep.subr.mxu0 0.0
    %272 = vmatpush1.msra.mxu0 0.0
    %273 = vmatprep.subr.mxu0 0.0
    %274 = vmatpush1.msra.mxu0 %v154
    %275 = vmatprep.subr.mxu0 0.0
    %276 = vmatpush1.msra.mxu0 %v149
    %277 = vmatprep.subr.mxu0 0.0
    %278 = vmatpush2.msra.mxu0 0.0
    %279 = vmatprep.subr.mxu0 0.0
    %280 = vmatpush2.msra.mxu0 0.0
    %281 = vmatprep.subr.mxu0 0.0
    %282 = vmatpush2.msra.mxu0 0.0
    %283 = vmatprep.subr.mxu0 0.0
    %284 = vmatpush2.msra.mxu0 0.0
    %285 = vmatprep.subr.mxu0 0.0
    %286 = vmatpush2.msra.mxu0 0.0
    %287 = vmatprep.subr.mxu0 0.0
    %288 = vmatpush2.msra.mxu0 0.0
    %289 = vmatprep.subr.mxu0 0.0
    %290 = vmatpush2.msra.mxu0 0.0
    %291 = vmatprep.subr.mxu0 0.0
    %292 = vmatpush2.msra.mxu0 0.0
    %293 = vmatprep.subr.mxu0 0.0
    %294 = vmatpush2.msra.mxu0 0.0
    %295 = vmatprep.subr.mxu0 0.0
    %296 = vmatpush2.msra.mxu0 0.0
    %297 = vmatprep.subr.mxu0 0.0
    %298 = vmatpush2.msra.mxu0 0.0
    %299 = vmatprep.subr.mxu0 0.0
    %300 = vmatpush2.msra.mxu0 0.0
    %301 = vmatprep.subr.mxu0 0.0
    %302 = vmatpush2.msra.mxu0 0.0
    %303 = vmatprep.subr.mxu0 0.0
    %304 = vmatpush2.msra.mxu0 0.0
    %305 = vmatprep.subr.mxu0 0.0
    %306 = vmatpush2.msra.mxu0 0.0
    %307 = vmatprep.subr.mxu0 0.0
    %308 = vmatpush2.msra.mxu0 0.0
    %309 = vmatprep.mubr.f32.mxu0 0.0
    %310 = vmatmul.mubr.f32.gmra.mxu0 %v240
    %v311 = vpop.f32.mrf.mxu0
    %v312 = vadd.f32 0.0, %v311
    %v313 = vpop.f32.mrf.mxu0
    %314 = vmatprep.mubr.f32.mxu0 0.0
    %315 = vmatmul.mubr.f32.gmra.mxu0 %v243
    %v316 = vpop.f32.mrf.mxu0
    %v317 = vadd.f32 0.0, %v316
    %v318 = vpop.f32.mrf.mxu0
    %319 = vdwg.mxu0
    %v320 = vmax.f32 %v231, 0.0
    %v321 = vmax.f32 %v236, 0.0
    %v322 = vmax.f32 %v312, 0.0
    %v323 = vmax.f32 %v317, 0.0
    %v324 = vld [vmem:[#allocation5] sm:$0xff]
    %v325 = vld [vmem:[#allocation5 + $0x8] sm:$0xff]
    %v326 = vld [vmem:[#allocation5 + $0x10] sm:$0xff]
    %v327 = vld [vmem:[#allocation5 + $0x18] sm:$0xff]
    %vm328 = vcmask 261120
    %v330 = vsel %vm328, %v320, 0
    %v333 = vsel %vm328, %v321, 0
    %v336 = vsel %vm328, %v322, 0
    %v339 = vsel %vm328, %v323, 0
    %341 = vmatprep.subr.mxu0 0.0
    %342 = vmatpush1.msra.mxu0 0.0
    %343 = vmatprep.subr.mxu0 0.0
    %344 = vmatpush1.msra.mxu0 0.0
    %345 = vmatprep.subr.mxu0 0.0
    %346 = vmatpush1.msra.mxu0 0.0
    %347 = vmatprep.subr.mxu0 0.0
    %348 = vmatpush1.msra.mxu0 0.0
    %349 = vmatprep.subr.mxu0 0.0
    %350 = vmatpush1.msra.mxu0 0.0
    %351 = vmatprep.subr.mxu0 0.0
    %352 = vmatpush1.msra.mxu0 0.0
    %353 = vmatprep.subr.mxu0 0.0
    %354 = vmatpush1.msra.mxu0 0.0
    %355 = vmatprep.subr.mxu0 0.0
    %356 = vmatpush1.msra.mxu0 0.0
    %357 = vmatprep.subr.mxu0 0.0
    %358 = vmatpush1.msra.mxu0 0.0
    %359 = vmatprep.subr.mxu0 0.0
    %360 = vmatpush1.msra.mxu0 0.0
    %361 = vmatprep.subr.mxu0 0.0
    %362 = vmatpush1.msra.mxu0 0.0
    %363 = vmatprep.subr.mxu0 0.0
    %364 = vmatpush1.msra.mxu0 0.0
    %365 = vmatprep.subr.mxu0 0.0
    %366 = vmatpush1.msra.mxu0 %v327
    %367 = vmatprep.subr.mxu0 0.0
    %368 = vmatpush1.msra.mxu0 %v326
    %369 = vmatprep.subr.mxu0 0.0
    %370 = vmatpush1.msra.mxu0 %v325
    %371 = vmatprep.subr.mxu0 0.0
    %372 = vmatpush1.msra.mxu0 %v324
    %373 = vmatprep.subr.mxu0 0.0
    %374 = vmatpush2.msra.mxu0 0.0
    %375 = vmatprep.subr.mxu0 0.0
    %376 = vmatpush2.msra.mxu0 0.0
    %377 = vmatprep.subr.mxu0 0.0
    %378 = vmatpush2.msra.mxu0 0.0
    %379 = vmatprep.subr.mxu0 0.0
    %380 = vmatpush2.msra.mxu0 0.0
    %381 = vmatprep.subr.mxu0 0.0
    %382 = vmatpush2.msra.mxu0 0.0
    %383 = vmatprep.subr.mxu0 0.0
    %384 = vmatpush2.msra.mxu0 0.0
    %385 = vmatprep.subr.mxu0 0.0
    %386 = vmatpush2.msra.mxu0 0.0
    %387 = vmatprep.subr.mxu0 0.0
    %388 = vmatpush2.msra.mxu0 0.0
    %389 = vmatprep.subr.mxu0 0.0
    %390 = vmatpush2.msra.mxu0 0.0
    %391 = vmatprep.subr.mxu0 0.0
    %392 = vmatpush2.msra.mxu0 0.0
    %393 = vmatprep.subr.mxu0 0.0
    %394 = vmatpush2.msra.mxu0 0.0
    %395 = vmatprep.subr.mxu0 0.0
    %396 = vmatpush2.msra.mxu0 0.0
    %397 = vmatprep.subr.mxu0 0.0
    %398 = vmatpush2.msra.mxu0 0.0
    %399 = vmatprep.subr.mxu0 0.0
    %400 = vmatpush2.msra.mxu0 0.0
    %401 = vmatprep.subr.mxu0 0.0
    %402 = vmatpush2.msra.mxu0 0.0
    %403 = vmatprep.subr.mxu0 0.0
    %404 = vmatpush2.msra.mxu0 0.0
    %405 = vmatprep.mubr.f32.mxu0 0.0
    %406 = vmatmul.mubr.f32.gmra.mxu0 %v330
    %v407 = vpop.f32.mrf.mxu0
    %v408 = vadd.f32 0.0, %v407
    %v409 = vpop.f32.mrf.mxu0
    %410 = vmatprep.mubr.f32.mxu0 0.0
    %411 = vmatmul.mubr.f32.gmra.mxu0 %v333
    %v412 = vpop.f32.mrf.mxu0
    %v413 = vadd.f32 0.0, %v412
    %v414 = vpop.f32.mrf.mxu0
    %415 = vmatprep.mubr.f32.mxu0 0.0
    %416 = vmatmul.mubr.f32.gmra.mxu0 %v336
    %v417 = vpop.f32.mrf.mxu0
    %v418 = vadd.f32 0.0, %v417
    %v419 = vpop.f32.mrf.mxu0
    %420 = vmatprep.mubr.f32.mxu0 0.0
    %421 = vmatmul.mubr.f32.gmra.mxu0 %v339
    %v422 = vpop.f32.mrf.mxu0
    %v423 = vadd.f32 0.0, %v422
    %v424 = vpop.f32.mrf.mxu0
    %425 = vdwg.mxu0
    %426 = vmatprep.subr.mxu0 0.0
    %427 = vmatpush1.msra.mxu0 0.0
    %428 = vmatprep.subr.mxu0 0.0
    %429 = vmatpush1.msra.mxu0 0.0
    %430 = vmatprep.subr.mxu0 0.0
    %431 = vmatpush1.msra.mxu0 0.0
    %432 = vmatprep.subr.mxu0 0.0
    %433 = vmatpush1.msra.mxu0 0.0
    %434 = vmatprep.subr.mxu0 0.0
    %435 = vmatpush1.msra.mxu0 0.0
    %436 = vmatprep.subr.mxu0 0.0
    %437 = vmatpush1.msra.mxu0 0.0
    %438 = vmatprep.subr.mxu0 0.0
    %439 = vmatpush1.msra.mxu0 0.0
    %440 = vmatprep.subr.mxu0 0.0
    %441 = vmatpush1.msra.mxu0 0.0
    %442 = vmatprep.subr.mxu0 0.0
    %443 = vmatpush1.msra.mxu0 0.0
    %444 = vmatprep.subr.mxu0 0.0
    %445 = vmatpush1.msra.mxu0 0.0
    %446 = vmatprep.subr.mxu0 0.0
    %447 = vmatpush1.msra.mxu0 0.0
    %448 = vmatprep.subr.mxu0 0.0
    %449 = vmatpush1.msra.mxu0 0.0
    %450 = vmatprep.subr.mxu0 0.0
    %451 = vmatpush1.msra.mxu0 0.0
    %452 = vmatprep.subr.mxu0 0.0
    %453 = vmatpush1.msra.mxu0 0.0
    %454 = vmatprep.subr.mxu0 0.0
    %455 = vmatpush1.msra.mxu0 %v413
    %456 = vmatprep.subr.mxu0 0.0
    %457 = vmatpush1.msra.mxu0 %v408
    %458 = vmatprep.subr.mxu0 0.0
    %459 = vmatpush2.msra.mxu0 0.0
    %460 = vmatprep.subr.mxu0 0.0
    %461 = vmatpush2.msra.mxu0 0.0
    %462 = vmatprep.subr.mxu0 0.0
    %463 = vmatpush2.msra.mxu0 0.0
    %464 = vmatprep.subr.mxu0 0.0
    %465 = vmatpush2.msra.mxu0 0.0
    %466 = vmatprep.subr.mxu0 0.0
    %467 = vmatpush2.msra.mxu0 0.0
    %468 = vmatprep.subr.mxu0 0.0
    %469 = vmatpush2.msra.mxu0 0.0
    %470 = vmatprep.subr.mxu0 0.0
    %471 = vmatpush2.msra.mxu0 0.0
    %472 = vmatprep.subr.mxu0 0.0
    %473 = vmatpush2.msra.mxu0 0.0
    %474 = vmatprep.subr.mxu0 0.0
    %475 = vmatpush2.msra.mxu0 0.0
    %476 = vmatprep.subr.mxu0 0.0
    %477 = vmatpush2.msra.mxu0 0.0
    %478 = vmatprep.subr.mxu0 0.0
    %479 = vmatpush2.msra.mxu0 0.0
    %480 = vmatprep.subr.mxu0 0.0
    %481 = vmatpush2.msra.mxu0 0.0
    %482 = vmatprep.subr.mxu0 0.0
    %483 = vmatpush2.msra.mxu0 0.0
    %484 = vmatprep.subr.mxu0 0.0
    %485 = vmatpush2.msra.mxu0 0.0
    %486 = vmatprep.subr.mxu0 0.0
    %487 = vmatpush2.msra.mxu0 0.0
    %488 = vmatprep.subr.mxu0 0.0
    %489 = vmatpush2.msra.mxu0 0.0
    %490 = vmatprep.mubr.f32.mxu0 0.0
    %491 = vmatmul.mubr.f32.gmra.mxu0 %v159
    %v492 = vpop.f32.mrf.mxu0
    %v493 = vadd.f32 0.0, %v492
    %v494 = vpop.f32.mrf.mxu0
    %495 = vmatprep.mubr.f32.mxu0 0.0
    %496 = vmatmul.mubr.f32.gmra.mxu0 %v162
    %v497 = vpop.f32.mrf.mxu0
    %v498 = vadd.f32 0.0, %v497
    %v499 = vpop.f32.mrf.mxu0
    %500 = vdwg.mxu0
    %501 = vmatprep.subr.mxu0 0.0
    %502 = vmatpush1.msra.mxu0 0.0
    %503 = vmatprep.subr.mxu0 0.0
    %504 = vmatpush1.msra.mxu0 0.0
    %505 = vmatprep.subr.mxu0 0.0
    %506 = vmatpush1.msra.mxu0 0.0
    %507 = vmatprep.subr.mxu0 0.0
    %508 = vmatpush1.msra.mxu0 0.0
    %509 = vmatprep.subr.mxu0 0.0
    %510 = vmatpush1.msra.mxu0 0.0
    %511 = vmatprep.subr.mxu0 0.0
    %512 = vmatpush1.msra.mxu0 0.0
    %513 = vmatprep.subr.mxu0 0.0
    %514 = vmatpush1.msra.mxu0 0.0
    %515 = vmatprep.subr.mxu0 0.0
    %516 = vmatpush1.msra.mxu0 0.0
    %517 = vmatprep.subr.mxu0 0.0
    %518 = vmatpush1.msra.mxu0 0.0
    %519 = vmatprep.subr.mxu0 0.0
    %520 = vmatpush1.msra.mxu0 0.0
    %521 = vmatprep.subr.mxu0 0.0
    %522 = vmatpush1.msra.mxu0 0.0
    %523 = vmatprep.subr.mxu0 0.0
    %524 = vmatpush1.msra.mxu0 0.0
    %525 = vmatprep.subr.mxu0 0.0
    %526 = vmatpush1.msra.mxu0 0.0
    %527 = vmatprep.subr.mxu0 0.0
    %528 = vmatpush1.msra.mxu0 0.0
    %529 = vmatprep.subr.mxu0 0.0
    %530 = vmatpush1.msra.mxu0 %v423
    %531 = vmatprep.subr.mxu0 0.0
    %532 = vmatpush1.msra.mxu0 %v418
    %533 = vmatprep.subr.mxu0 0.0
    %534 = vmatpush2.msra.mxu0 0.0
    %535 = vmatprep.subr.mxu0 0.0
    %536 = vmatpush2.msra.mxu0 0.0
    %537 = vmatprep.subr.mxu0 0.0
    %538 = vmatpush2.msra.mxu0 0.0
    %539 = vmatprep.subr.mxu0 0.0
    %540 = vmatpush2.msra.mxu0 0.0
    %541 = vmatprep.subr.mxu0 0.0
    %542 = vmatpush2.msra.mxu0 0.0
    %543 = vmatprep.subr.mxu0 0.0
    %544 = vmatpush2.msra.mxu0 0.0
    %545 = vmatprep.subr.mxu0 0.0
    %546 = vmatpush2.msra.mxu0 0.0
    %547 = vmatprep.subr.mxu0 0.0
    %548 = vmatpush2.msra.mxu0 0.0
    %549 = vmatprep.subr.mxu0 0.0
    %550 = vmatpush2.msra.mxu0 0.0
    %551 = vmatprep.subr.mxu0 0.0
    %552 = vmatpush2.msra.mxu0 0.0
    %553 = vmatprep.subr.mxu0 0.0
    %554 = vmatpush2.msra.mxu0 0.0
    %555 = vmatprep.subr.mxu0 0.0
    %556 = vmatpush2.msra.mxu0 0.0
    %557 = vmatprep.subr.mxu0 0.0
    %558 = vmatpush2.msra.mxu0 0.0
    %559 = vmatprep.subr.mxu0 0.0
    %560 = vmatpush2.msra.mxu0 0.0
    %561 = vmatprep.subr.mxu0 0.0
    %562 = vmatpush2.msra.mxu0 0.0
    %563 = vmatprep.subr.mxu0 0.0
    %564 = vmatpush2.msra.mxu0 0.0
    %565 = vmatprep.mubr.f32.mxu0 0.0
    %566 = vmatmul.mubr.f32.gmra.mxu0 %v240
    %v567 = vpop.f32.mrf.mxu0
    %v568 = vadd.f32 0.0, %v567
    %v569 = vpop.f32.mrf.mxu0
    %570 = vmatprep.mubr.f32.mxu0 0.0
    %571 = vmatmul.mubr.f32.gmra.mxu0 %v243
    %v572 = vpop.f32.mrf.mxu0
    %v573 = vadd.f32 0.0, %v572
    %v574 = vpop.f32.mrf.mxu0
    %575 = vdwg.mxu0
    %v576 = vmax.f32 %v493, 0.0
    %v577 = vmax.f32 %v498, 0.0
    %v578 = vmax.f32 %v568, 0.0
    %v579 = vmax.f32 %v573, 0.0
    %v580 = vsel %vm328, %v576, 0.0
    %581 = vadd.xlane.f32.xlu0 %v580
    %v582 = vpop.xlane.xlu0 %581
    %v583 = vsel %vm328, %v577, 0.0
    %584 = vadd.xlane.f32.xlu0 %v583
    %v585 = vpop.xlane.xlu0 %584
    %v586 = vsel %vm328, %v578, 0.0
    %587 = vadd.xlane.f32.xlu0 %v586
    %v588 = vpop.xlane.xlu0 %587
    %v589 = vsel %vm328, %v579, 0.0
    %590 = vadd.xlane.f32.xlu0 %v589
    %v591 = vpop.xlane.xlu0 %590
    %v592 = vld [vmem:[%s4] sm:$0xff]
    %v593 = vld [vmem:[%s4 + $0x8] sm:$0xff]
    %v594 = vld [vmem:[%s5] sm:$0x1]
    %v596 = vlaneseq
    %v597 = vshrl.u32 %v596, 7
    %v598 = vsub.s32 0, %v597
    %v599 = vrot.slane %v594, %v598
    %v605 = vlaneseq
    %v606 = vand.u32 %v605, 127
    %v607 = vlaneseq
    %v608 = vshrl.u32 %v607, 7
    %v609 = vsub.s32 %v606, %v608
    %v610 = vrot.slane %v582, %v609
    %v611 = vadd.s32 %v606, 4294967288
    %v612 = vlaneseq
    %v613 = vshrl.u32 %v612, 7
    %v614 = vsub.s32 %v611, %v613
    %v615 = vrot.slane %v585, %v614
    %vm616 = vcmask 130112
    %v617 = vsel %vm616, %v615, %v610
    %v618 = vlaneseq
    %v619 = vshrl.u32 %v618, 7
    %v620 = vsub.s32 %v606, %v619
    %v621 = vrot.slane %v588, %v620
    %v622 = vlaneseq
    %v623 = vshrl.u32 %v622, 7
    %v624 = vsub.s32 %v611, %v623
    %v625 = vrot.slane %v591, %v624
    %v626 = vsel %vm616, %v625, %v621
    %vm627 = vcmask 1041409
    %v628 = vsel %vm627, %v626, %v617
    %v629 = vsel %vm157, %v628, 0
    %631 = vmatprep.subr.mxu0 0.0
    %632 = vmatpush1.msra.mxu0 0.0
    %633 = vmatprep.subr.mxu0 0.0
    %634 = vmatpush1.msra.mxu0 0.0
    %635 = vmatprep.subr.mxu0 0.0
    %636 = vmatpush1.msra.mxu0 0.0
    %637 = vmatprep.subr.mxu0 0.0
    %638 = vmatpush1.msra.mxu0 0.0
    %639 = vmatprep.subr.mxu0 0.0
    %640 = vmatpush1.msra.mxu0 0.0
    %641 = vmatprep.subr.mxu0 0.0
    %642 = vmatpush1.msra.mxu0 0.0
    %643 = vmatprep.subr.mxu0 0.0
    %644 = vmatpush1.msra.mxu0 0.0
    %645 = vmatprep.subr.mxu0 0.0
    %646 = vmatpush1.msra.mxu0 0.0
    %647 = vmatprep.subr.mxu0 0.0
    %648 = vmatpush1.msra.mxu0 0.0
    %649 = vmatprep.subr.mxu0 0.0
    %650 = vmatpush1.msra.mxu0 0.0
    %651 = vmatprep.subr.mxu0 0.0
    %652 = vmatpush1.msra.mxu0 0.0
    %653 = vmatprep.subr.mxu0 0.0
    %654 = vmatpush1.msra.mxu0 0.0
    %655 = vmatprep.subr.mxu0 0.0
    %656 = vmatpush1.msra.mxu0 0.0
    %657 = vmatprep.subr.mxu0 0.0
    %658 = vmatpush1.msra.mxu0 0.0
    %659 = vmatprep.subr.mxu0 0.0
    %660 = vmatpush1.msra.mxu0 %v593
    %661 = vmatprep.subr.mxu0 0.0
    %662 = vmatpush1.msra.mxu0 %v592
    %663 = vmatprep.subr.mxu0 0.0
    %664 = vmatpush2.msra.mxu0 0.0
    %665 = vmatprep.subr.mxu0 0.0
    %666 = vmatpush2.msra.mxu0 0.0
    %667 = vmatprep.subr.mxu0 0.0
    %668 = vmatpush2.msra.mxu0 0.0
    %669 = vmatprep.subr.mxu0 0.0
    %670 = vmatpush2.msra.mxu0 0.0
    %671 = vmatprep.subr.mxu0 0.0
    %672 = vmatpush2.msra.mxu0 0.0
    %673 = vmatprep.subr.mxu0 0.0
    %674 = vmatpush2.msra.mxu0 0.0
    %675 = vmatprep.subr.mxu0 0.0
    %676 = vmatpush2.msra.mxu0 0.0
    %677 = vmatprep.subr.mxu0 0.0
    %678 = vmatpush2.msra.mxu0 0.0
    %679 = vmatprep.subr.mxu0 0.0
    %680 = vmatpush2.msra.mxu0 0.0
    %681 = vmatprep.subr.mxu0 0.0
    %682 = vmatpush2.msra.mxu0 0.0
    %683 = vmatprep.subr.mxu0 0.0
    %684 = vmatpush2.msra.mxu0 0.0
    %685 = vmatprep.subr.mxu0 0.0
    %686 = vmatpush2.msra.mxu0 0.0
    %687 = vmatprep.subr.mxu0 0.0
    %688 = vmatpush2.msra.mxu0 0.0
    %689 = vmatprep.subr.mxu0 0.0
    %690 = vmatpush2.msra.mxu0 0.0
    %691 = vmatprep.subr.mxu0 0.0
    %692 = vmatpush2.msra.mxu0 0.0
    %693 = vmatprep.subr.mxu0 0.0
    %694 = vmatpush2.msra.mxu0 0.0
    %695 = vmatprep.mubr.f32.mxu0 0.0
    %696 = vmatmul.mubr.f32.gmra.mxu0 %v629
    %v697 = vpop.f32.mrf.mxu0
    %v698 = vadd.f32 %v599, %v697
    %v699 = vpop.f32.mrf.mxu0
    %700 = vdwg.mxu0
    %701 = vst [vmem:[#allocation7] sm:$0x3] %v698
    // Predicated region
    $region34: #{tpu_custom_call.1} parent=1 // pred_check
      _
    $region35: #{tpu_custom_call.1} parent=1 // pred_check_branch
      %703 = sbr.rel (0) target = $region37
    $region36: #{tpu_custom_call.1} parent=1 // pred_region
      %s705 = ssub.s32 32, 32
      %706 = vsyncadd [#allocation4], %s705
      %s708 = sshll.u32 [#allocation7], 4
      %s709 = int_to_ptr.vmem [resolvable:$true] %s708
      %711 = dma.vmem_to_hbm [thread:$0]  %s709, 32, %s6, [#allocation4]
    $region37: #{tpu_custom_call.1} parent=1 // pred_fallthru
      _
    // Predicated region
    $region38: #{tpu_custom_call.1} parent=1 // pred_check
      _
    $region39: #{tpu_custom_call.1} parent=1 // pred_check_branch
      %713 = sbr.rel (0) target = $region41
    $region40: #{tpu_custom_call.1} parent=1 // pred_region
      %714 = dma.done [#allocation4], 32
    $region41: #{tpu_custom_call.1} parent=1 // pred_fallthru
      _
    %715 = vsyncpa [#allocation3], 1
    %716 = vsyncpa [#allocation6], 1
    %717 = vsyncpa [#allocation4], 1

</llo_original>
